<compile_context>
chip_gen: v6e
topology: v6e:2x2x1
jax: 0.10.0
libtpu: 0.0.40
codegen_flags: <defaults>
</compile_context>

<pallas_src>
import functools

import jax
import jax.numpy as jnp
from jax.experimental import pallas as pl
from jax.experimental.pallas import tpu as pltpu


def _round_up(x, m):
    return (x + m - 1) // m * m


def _fused_gcn_kernel(a_ref, x_ref, w1_ref, w2_ref, b1_ref, b2_ref,
                      out_ref, z_ref, h_ref, *, tm):
    """Grid point (l, i): layer l in {0, 1}, row tile i of A_hat."""
    l = pl.program_id(0)
    i = pl.program_id(1)

    # Feature transform computed ONCE per layer (not per row tile) into a
    # persistent VMEM scratch:  Z1 = X @ W1   then   Z2 = H1 @ W2.
    @pl.when(jnp.logical_and(l == 0, i == 0))
    def _():
        z_ref[...] = jnp.dot(
            x_ref[...], w1_ref[...], preferred_element_type=jnp.float32
        ).astype(z_ref.dtype)

    @pl.when(jnp.logical_and(l == 1, i == 0))
    def _():
        z_ref[...] = jnp.dot(
            h_ref[...], w2_ref[...], preferred_element_type=jnp.float32
        ).astype(z_ref.dtype)

    # Neighborhood aggregation for this row tile: A_hat[tile, :] @ Z  (MXU,
    # f32 accumulation).
    agg = jnp.dot(a_ref[...], z_ref[...], preferred_element_type=jnp.float32)

    @pl.when(l == 0)
    def _():
        h = jnp.maximum(agg + b1_ref[...], 0.0)
        row = pl.multiple_of(i * tm, tm)
        h_ref[pl.ds(row, tm), :] = h.astype(h_ref.dtype)
        # Also fill the output buffer (deterministic; overwritten by layer 1).
        out_ref[...] = h.astype(out_ref.dtype)

    @pl.when(l == 1)
    def _():
        out_ref[...] = (agg + b2_ref[...]).astype(out_ref.dtype)


def gcn_forward(params, x, a_hat, *, compute_dtype=jnp.bfloat16, tile_m=256):
    """Fused GCN forward: relu(A@ (X W1)+b1) -> (identity dropout) -> A@(. W2)+b2."""
    w1, b1, w2, b2 = params
    n, f_in = x.shape
    h_dim = w1.shape[1]
    assert w2.shape == (h_dim, h_dim)

    lane = 128
    f_pad = _round_up(f_in, lane)
    h_pad = _round_up(h_dim, lane)
    tm = min(tile_m, _round_up(n, 8))          # row tile (multiple of 8 sublanes)
    n_pad = _round_up(n, tm)
    n_tiles = n_pad // tm

    cd = compute_dtype
    f32 = jnp.float32
    # Zero-pad to TPU-friendly shapes; padded rows/cols contribute nothing.
    a_p = jnp.zeros((n_pad, n_pad), cd).at[:n, :n].set(a_hat.astype(cd))
    x_p = jnp.zeros((n_pad, f_pad), cd).at[:n, :f_in].set(x.astype(cd))
    w1_p = jnp.zeros((f_pad, h_pad), cd).at[:f_in, :h_dim].set(w1.astype(cd))
    w2_p = jnp.zeros((h_pad, h_pad), cd).at[:h_dim, :h_dim].set(w2.astype(cd))
    b1_p = jnp.zeros((1, h_pad), f32).at[:, :h_dim].set(b1.astype(f32))
    b2_p = jnp.zeros((1, h_pad), f32).at[:, :h_dim].set(b2.astype(f32))

    # VMEM footprint estimate (double-buffered A row tile, resident X/W/b,
    # two persistent scratches, output tiles).  Only raise the scoped limit
    # when the conservative default would not fit (keeps v7x's 64 MiB happy).
    bpe = jnp.dtype(cd).itemsize
    vmem_est = (2 * tm * n_pad * bpe          # A_hat row tile, double buffered
                + 2 * n_pad * f_pad * bpe     # X
                + 2 * n_pad * h_pad * bpe     # Z + H1 scratch
                + (f_pad + h_pad) * h_pad * bpe
                + 4 * tm * h_pad * 4)
    compiler_kwargs = {}
    if vmem_est > 12 * 1024 * 1024:
        compiler_kwargs["vmem_limit_bytes"] = min(
            int(1.5 * vmem_est) + (4 << 20), 48 << 20)

    kernel = functools.partial(_fused_gcn_kernel, tm=tm)

    out_p = pl.pallas_call(
        kernel,
        out_shape=jax.ShapeDtypeStruct((n_pad, h_pad), jnp.float32),
        grid_spec=pltpu.PrefetchScalarGridSpec(
            num_scalar_prefetch=0,
            grid=(2, n_tiles),                       # (layer, row tile)
            in_specs=[
                pl.BlockSpec((tm, n_pad), lambda l, i: (i, 0)),     # A_hat rows
                pl.BlockSpec((n_pad, f_pad), lambda l, i: (0, 0)),  # X
                pl.BlockSpec((f_pad, h_pad), lambda l, i: (0, 0)),  # W1
                pl.BlockSpec((h_pad, h_pad), lambda l, i: (0, 0)),  # W2
                pl.BlockSpec((1, h_pad), lambda l, i: (0, 0)),      # b1
                pl.BlockSpec((1, h_pad), lambda l, i: (0, 0)),      # b2
            ],
            out_specs=pl.BlockSpec((tm, h_pad), lambda l, i: (i, 0)),
            scratch_shapes=[
                pltpu.VMEM((n_pad, h_pad), cd),   # Z  (= X@W1, then H1@W2)
                pltpu.VMEM((n_pad, h_pad), cd),   # H1 (post relu + bias)
            ],
        ),
        compiler_params=pltpu.CompilerParams(
            # Both axes carry state through the VMEM scratches (Z, H1), so the
            # whole grid must run sequentially on one TensorCore.
            dimension_semantics=("arbitrary", "arbitrary"),
            **compiler_kwargs,
        ),
    )(a_p, x_p, w1_p, w2_p, b1_p, b2_p)

    return out_p[:n, :h_dim]


def build_normalized_adjacency(edge_index, num_nodes):
    """Dense A_hat = D^{-1/2} (A + I) D^{-1/2}, A[i, j] = #edges j -> i (PyG gcn_norm)."""
    src = edge_index[0]
    dst = edge_index[1]
    a = jnp.zeros((num_nodes, num_nodes), jnp.float32)
    a = a.at[dst, src].add(1.0)                        # duplicate edges accumulate
    a = a + jnp.eye(num_nodes, dtype=jnp.float32)      # self-loop weight 1, always added
    deg = a.sum(axis=1)
    d_inv_sqrt = jnp.where(deg > 0, jax.lax.rsqrt(deg), 0.0)
    return d_inv_sqrt[:, None] * a * d_inv_sqrt[None, :]
    # TODO(synk): for large sparse graphs, replace the dense A_hat with a
    # scalar-prefetch / gather-based sparse aggregation kernel.


def glorot(key, fan_in, fan_out):
    limit = jnp.sqrt(6.0 / (fan_in + fan_out))
    return jax.random.uniform(
        key, (fan_in, fan_out), jnp.float32, minval=-limit, maxval=limit
    )


if __name__ == "__main__":
    key = jax.random.PRNGKey(0)
    k_x, k_e, k_w1, k_w2 = jax.random.split(key, 4)

    num_nodes = 64
    num_edges = 256
    num_features = 16
    n_hidden = 32

    # Deterministic synthetic graph data.
    x = jax.random.normal(k_x, (num_nodes, num_features), jnp.float32)
    edge_index = jax.random.randint(
        k_e, (2, num_edges), minval=0, maxval=num_nodes, dtype=jnp.int32
    )

    # Deterministic parameter init (GCNConv: glorot weight, zero bias).
    w1 = glorot(k_w1, num_features, n_hidden)
    b1 = jnp.zeros((1, n_hidden), jnp.float32)
    w2 = glorot(k_w2, n_hidden, n_hidden)
    b2 = jnp.zeros((1, n_hidden), jnp.float32)
    params = (w1, b1, w2, b2)

    a_hat = build_normalized_adjacency(edge_index, num_nodes)

    # TODO(synk): training-mode dropout (pltpu.prng_random_bits mask) not wired in;
    # forward matches eval mode (dropout = identity), as in the original module's inference path.
    out = gcn_forward(params, x, a_hat)
    out = jax.block_until_ready(out)

    # Pure-JAX f32 reference; kernel runs matmuls in bf16 with f32 accumulation,
    # so allow bf16-level tolerance.
    ref_h = jnp.maximum(a_hat @ (x @ w1) + b1, 0.0)
    ref_out = a_hat @ (ref_h @ w2) + b2
    assert out.shape == (num_nodes, n_hidden)
    max_err = float(jnp.max(jnp.abs(out - ref_out)))
    assert jnp.allclose(out, ref_out, atol=5e-2, rtol=5e-2), max_err

    print("KERNEL_OK")
</pallas_src>

<mosaic_0001>
module attributes {stable_mosaic.version = 11 : i64} {
  func.func @_fused_gcn_kernel(%arg0: i32, %arg1: i32, %arg2: memref<64x64xbf16, #tpu.memory_space<vmem>>, %arg3: memref<64x128xbf16, #tpu.memory_space<vmem>>, %arg4: memref<128x128xbf16, #tpu.memory_space<vmem>>, %arg5: memref<128x128xbf16, #tpu.memory_space<vmem>>, %arg6: memref<1x128xf32, #tpu.memory_space<vmem>>, %arg7: memref<1x128xf32, #tpu.memory_space<vmem>>, %arg8: memref<64x128xf32, #tpu.memory_space<vmem>>, %arg9: memref<64x128xbf16, #tpu.memory_space<vmem>>, %arg10: memref<64x128xbf16, #tpu.memory_space<vmem>>) attributes {dimension_semantics = [#tpu.dimension_semantics<arbitrary>, #tpu.dimension_semantics<arbitrary>], iteration_bounds = array<i64: 2, 1>, scalar_prefetch = 0 : i64, scratch_operands = 2 : i64, tpu.core_type = #tpu.core_type<tc>, window_params = [{transform_indices = @transform_0, window_bounds = array<i64: 64, 64>}, {pipeline_mode = #tpu.pipeline_mode<synchronous>, transform_indices = @transform_1, window_bounds = array<i64: 64, 128>}, {pipeline_mode = #tpu.pipeline_mode<synchronous>, transform_indices = @transform_2, window_bounds = array<i64: 128, 128>}, {pipeline_mode = #tpu.pipeline_mode<synchronous>, transform_indices = @transform_3, window_bounds = array<i64: 128, 128>}, {pipeline_mode = #tpu.pipeline_mode<synchronous>, transform_indices = @transform_4, window_bounds = array<i64: 1, 128>}, {pipeline_mode = #tpu.pipeline_mode<synchronous>, transform_indices = @transform_5, window_bounds = array<i64: 1, 128>}, {transform_indices = @transform_6, window_bounds = array<i64: 64, 128>}]} {
    %c0_i32 = arith.constant 0 : i32
    %0 = arith.cmpi eq, %arg0, %c0_i32 : i32
    %c0_i32_0 = arith.constant 0 : i32
    %1 = arith.cmpi eq, %arg1, %c0_i32_0 : i32
    %2 = arith.andi %0, %1 : i1
    %3 = arith.extui %2 : i1 to i32
    %c0_i32_1 = arith.constant 0 : i32
    %4 = arith.cmpi ne, %3, %c0_i32_1 : i32
    scf.if %4 {
      %c0_11 = arith.constant 0 : index
      %c0_12 = arith.constant 0 : index
      %19 = vector.load %arg3[%c0_11, %c0_12] : memref<64x128xbf16, #tpu.memory_space<vmem>>, vector<64x128xbf16>
      %c0_13 = arith.constant 0 : index
      %c0_14 = arith.constant 0 : index
      %20 = vector.load %arg4[%c0_13, %c0_14] : memref<128x128xbf16, #tpu.memory_space<vmem>>, vector<128x128xbf16>
      %cst_15 = arith.constant dense<0.000000e+00> : vector<64x128xf32>
      %21 = tpu.matmul %19, %20, %cst_15 {dimension_numbers = #tpu.dot_dimension_numbers<[1], [0], [0], [1], [0, 0, 1, 1], [], []>} : vector<64x128xbf16>, vector<128x128xbf16>, vector<64x128xf32> -> vector<64x128xf32>
      %22 = arith.truncf %21 : vector<64x128xf32> to vector<64x128xbf16>
      %c0_16 = arith.constant 0 : index
      %c0_17 = arith.constant 0 : index
      %23 = vector.load %arg9[%c0_16, %c0_17] : memref<64x128xbf16, #tpu.memory_space<vmem>>, vector<64x128xbf16>
      tpu.vector_store %arg9[%c0_16, %c0_17], %22 {strides = array<i32>} : memref<64x128xbf16, #tpu.memory_space<vmem>>, vector<64x128xbf16>,
    } else {
    }
    %c1_i32 = arith.constant 1 : i32
    %5 = arith.cmpi eq, %arg0, %c1_i32 : i32
    %c0_i32_2 = arith.constant 0 : i32
    %6 = arith.cmpi eq, %arg1, %c0_i32_2 : i32
    %7 = arith.andi %5, %6 : i1
    %8 = arith.extui %7 : i1 to i32
    %c0_i32_3 = arith.constant 0 : i32
    %9 = arith.cmpi ne, %8, %c0_i32_3 : i32
    scf.if %9 {
      %c0_11 = arith.constant 0 : index
      %c0_12 = arith.constant 0 : index
      %19 = vector.load %arg10[%c0_11, %c0_12] : memref<64x128xbf16, #tpu.memory_space<vmem>>, vector<64x128xbf16>
      %c0_13 = arith.constant 0 : index
      %c0_14 = arith.constant 0 : index
      %20 = vector.load %arg5[%c0_13, %c0_14] : memref<128x128xbf16, #tpu.memory_space<vmem>>, vector<128x128xbf16>
      %cst_15 = arith.constant dense<0.000000e+00> : vector<64x128xf32>
      %21 = tpu.matmul %19, %20, %cst_15 {dimension_numbers = #tpu.dot_dimension_numbers<[1], [0], [0], [1], [0, 0, 1, 1], [], []>} : vector<64x128xbf16>, vector<128x128xbf16>, vector<64x128xf32> -> vector<64x128xf32>
      %22 = arith.truncf %21 : vector<64x128xf32> to vector<64x128xbf16>
      %c0_16 = arith.constant 0 : index
      %c0_17 = arith.constant 0 : index
      %23 = vector.load %arg9[%c0_16, %c0_17] : memref<64x128xbf16, #tpu.memory_space<vmem>>, vector<64x128xbf16>
      tpu.vector_store %arg9[%c0_16, %c0_17], %22 {strides = array<i32>} : memref<64x128xbf16, #tpu.memory_space<vmem>>, vector<64x128xbf16>,
    } else {
    }
    %c0 = arith.constant 0 : index
    %c0_4 = arith.constant 0 : index
    %10 = vector.load %arg2[%c0, %c0_4] : memref<64x64xbf16, #tpu.memory_space<vmem>>, vector<64x64xbf16>
    %c0_5 = arith.constant 0 : index
    %c0_6 = arith.constant 0 : index
    %11 = vector.load %arg9[%c0_5, %c0_6] : memref<64x128xbf16, #tpu.memory_space<vmem>>, vector<64x128xbf16>
    %cst = arith.constant dense<0.000000e+00> : vector<64x128xf32>
    %12 = tpu.matmul %10, %11, %cst {dimension_numbers = #tpu.dot_dimension_numbers<[1], [0], [0], [1], [0, 0, 1, 1], [], []>} : vector<64x64xbf16>, vector<64x128xbf16>, vector<64x128xf32> -> vector<64x128xf32>
    %c0_i32_7 = arith.constant 0 : i32
    %13 = arith.cmpi eq, %arg0, %c0_i32_7 : i32
    %14 = arith.extui %13 : i1 to i32
    %c0_i32_8 = arith.constant 0 : i32
    %15 = arith.cmpi ne, %14, %c0_i32_8 : i32
    scf.if %15 {
      %c0_11 = arith.constant 0 : index
      %c0_12 = arith.constant 0 : index
      %19 = vector.load %arg6[%c0_11, %c0_12] : memref<1x128xf32, #tpu.memory_space<vmem>>, vector<1x128xf32>
      %20 = vector.broadcast %19 : vector<1x128xf32> to vector<64x128xf32>
      %21 = arith.addf %12, %20 : vector<64x128xf32>
      %cst_13 = arith.constant 0.000000e+00 : f32
      %22 = vector.broadcast %cst_13 : f32 to vector<64x128xf32>
      %23 = arith.maximumf %21, %22 : vector<64x128xf32>
      %c64_i32 = arith.constant 64 : i32
      %24 = arith.muli %arg1, %c64_i32 : i32
      %25 = tpu.assume_multiple %24, 64 : i32
      %26 = arith.truncf %23 : vector<64x128xf32> to vector<64x128xbf16>
      %27 = arith.index_cast %25 : i32 to index
      %c0_14 = arith.constant 0 : index
      %28 = vector.load %arg10[%27, %c0_14] : memref<64x128xbf16, #tpu.memory_space<vmem>>, vector<64x128xbf16>
      tpu.vector_store %arg10[%27, %c0_14], %26 {strides = array<i32>} : memref<64x128xbf16, #tpu.memory_space<vmem>>, vector<64x128xbf16>,
      %c0_15 = arith.constant 0 : index
      %c0_16 = arith.constant 0 : index
      %29 = vector.load %arg8[%c0_15, %c0_16] : memref<64x128xf32, #tpu.memory_space<vmem>>, vector<64x128xf32>
      tpu.vector_store %arg8[%c0_15, %c0_16], %23 {strides = array<i32>} : memref<64x128xf32, #tpu.memory_space<vmem>>, vector<64x128xf32>,
    } else {
    }
    %c1_i32_9 = arith.constant 1 : i32
    %16 = arith.cmpi eq, %arg0, %c1_i32_9 : i32
    %17 = arith.extui %16 : i1 to i32
    %c0_i32_10 = arith.constant 0 : i32
    %18 = arith.cmpi ne, %17, %c0_i32_10 : i32
    scf.if %18 {
      %c0_11 = arith.constant 0 : index
      %c0_12 = arith.constant 0 : index
      %19 = vector.load %arg7[%c0_11, %c0_12] : memref<1x128xf32, #tpu.memory_space<vmem>>, vector<1x128xf32>
      %20 = vector.broadcast %19 : vector<1x128xf32> to vector<64x128xf32>
      %21 = arith.addf %12, %20 : vector<64x128xf32>
      %c0_13 = arith.constant 0 : index
      %c0_14 = arith.constant 0 : index
      %22 = vector.load %arg8[%c0_13, %c0_14] : memref<64x128xf32, #tpu.memory_space<vmem>>, vector<64x128xf32>
      tpu.vector_store %arg8[%c0_13, %c0_14], %21 {strides = array<i32>} : memref<64x128xf32, #tpu.memory_space<vmem>>, vector<64x128xf32>,
    } else {
    }
    return
  }
  func.func @transform_0(%arg0: i32, %arg1: i32) -> (i32, i32) {
    %c0_i32 = arith.constant 0 : i32
    %c0_i32_0 = arith.constant 0 : i32
    return %arg1, %c0_i32 : i32, i32
  }
  func.func @transform_1(%arg0: i32, %arg1: i32) -> (i32, i32) {
    %c0_i32 = arith.constant 0 : i32
    %c0_i32_0 = arith.constant 0 : i32
    %c0_i32_1 = arith.constant 0 : i32
    return %c0_i32, %c0_i32_0 : i32, i32
  }
  func.func @transform_2(%arg0: i32, %arg1: i32) -> (i32, i32) {
    %c0_i32 = arith.constant 0 : i32
    %c0_i32_0 = arith.constant 0 : i32
    %c0_i32_1 = arith.constant 0 : i32
    return %c0_i32, %c0_i32_0 : i32, i32
  }
  func.func @transform_3(%arg0: i32, %arg1: i32) -> (i32, i32) {
    %c0_i32 = arith.constant 0 : i32
    %c0_i32_0 = arith.constant 0 : i32
    %c0_i32_1 = arith.constant 0 : i32
    return %c0_i32, %c0_i32_0 : i32, i32
  }
  func.func @transform_4(%arg0: i32, %arg1: i32) -> (i32, i32) {
    %c0_i32 = arith.constant 0 : i32
    %c0_i32_0 = arith.constant 0 : i32
    %c0_i32_1 = arith.constant 0 : i32
    return %c0_i32, %c0_i32_0 : i32, i32
  }
  func.func @transform_5(%arg0: i32, %arg1: i32) -> (i32, i32) {
    %c0_i32 = arith.constant 0 : i32
    %c0_i32_0 = arith.constant 0 : i32
    %c0_i32_1 = arith.constant 0 : i32
    return %c0_i32, %c0_i32_0 : i32, i32
  }
  func.func @transform_6(%arg0: i32, %arg1: i32) -> (i32, i32) {
    %c0_i32 = arith.constant 0 : i32
    %c0_i32_0 = arith.constant 0 : i32
    return %arg1, %c0_i32 : i32, i32
  }
}

</mosaic_0001>

<llo_original>
// kernel: tpu_custom_call.1
$region0: #{tpu_custom_call.1}
  #allocation0 [shape = 'u32[]', space=smem, size = 0x4, offset = 0x4, fixed_abs, tag = 'smem constant byte address 0x4 - core index']
  #allocation1 [shape = 'u32[144,128]{1,0:T(1,128)}', space=vmem, size = 0x12000, scoped, tag = 'internal scratch']
  #allocation2 [shape = 'bf16[64,128]{1,0:T(8,128)(2,1)}', space=vmem, size = 0x4000, scoped, tag = 'scratch operand']
  #allocation3 [shape = 'bf16[64,128]{1,0:T(8,128)(2,1)}', space=vmem, size = 0x4000, scoped, tag = 'scratch operand']
  %s0 = inlined_call_operand.hbm [shape: bf16[64,64], index: 0, kind: input, shape index: {}]
  %s1 = inlined_call_operand.hbm [shape: bf16[64,128], index: 1, kind: input, shape index: {}]
  %s2 = inlined_call_operand.hbm [shape: bf16[128,128], index: 2, kind: input, shape index: {}]
  %s3 = inlined_call_operand.hbm [shape: bf16[128,128], index: 3, kind: input, shape index: {}]
  %s4 = inlined_call_operand.vmem [shape: f32[1,128], index: 4, kind: input, shape index: {}]
  %s5 = inlined_call_operand.vmem [shape: f32[1,128], index: 5, kind: input, shape index: {}]
  %s6 = inlined_call_operand.hbm [shape: f32[64,128], index: 6, kind: output, shape index: {}]
  %s7 = sld [smem:[#allocation0]]
  $region89: #{tpu_custom_call.1} parent=0
    _
  %s9 = ssub.s32 1, %s7
  %s10 = scalar_select 0, %s9, %s7
  $region1: #{tpu_custom_call.1} parent=0
    #allocation4 [shape = 'u8[16384]{0}', space=vmem, size = 0x4000, scoped, tag = 'input window, operand 0, single buffered']
    #allocation5 [shape = 's32[2]{0}', space=sflag, size = 0x8, scoped, tag = 'scoped memory for tpu_custom_call.1']
    #allocation6 [shape = 's32[2]{0}', space=sflag, size = 0x8, scoped, tag = 'scoped memory for tpu_custom_call.1']
    #allocation7 [shape = 'u8[16384]{0}', space=vmem, size = 0x4000, scoped, tag = 'input window, operand 1, single buffered']
    #allocation8 [shape = 's32[1]{0}', space=sflag, size = 0x4, scoped, tag = 'scoped memory for tpu_custom_call.1']
    #allocation9 [shape = 'u8[32768]{0}', space=vmem, size = 0x8000, scoped, tag = 'input window, operand 2, single buffered']
    #allocation10 [shape = 'u8[32768]{0}', space=vmem, size = 0x8000, scoped, tag = 'input window, operand 3, single buffered']
    #allocation11 [shape = 's32[1]{0}', space=sflag, size = 0x4, scoped, tag = 'scoped memory for tpu_custom_call.1']
    #allocation12 [shape = 'u8[32768]{0}', space=vmem, size = 0x8000, scoped, tag = 'output window, operand 0, single buffered']
    %11 = vsyncpa [#allocation5], 0
    %12 = vsyncpa [#allocation8], 0
    %13 = vsyncpa [#allocation11], 0
    %14 = vsyncpa [#allocation6], 0
    loop: start=0, step=1, limit=4
    $region2: #{tpu_custom_call.1} parent=1 // loop_pre_header
      _
    $region3: #{tpu_custom_call.1} parent=1 // loop_header
      %s16 = sphi 0, %s20
      %p17 = scmp.ge.s32.totalorder %s16, 4
      %s23 = sphi 0, %s35
      %s24 = sphi 0, %s31
      %s25 = sphi 0, %s23
      %s26 = sphi 0, %s24
      %s27 = sphi 0, %s25
      %s28 = sphi 0, %s26
      %s38 = sphi 0, %s40
      %s41 = sphi 0, %s38
      %s42 = sphi 0, %s41
      %s58 = sphi 0, %s42
      %s62 = sphi 0, %s62
      %s64 = sphi 0, %s62
      %s65 = sphi 0, %s64
      %s79 = sphi 0, %s65
      %s83 = sphi 0, %s83
      %s85 = sphi 0, %s83
      %s86 = sphi 0, %s85
      %s100 = sphi 0, %s86
      %s104 = sphi 0, %s104
      %s106 = sphi 0, %s104
      %s107 = sphi 0, %s106
      %s121 = sphi 0, %s107
      %s125 = sphi 0, %s125
      %s127 = sphi 0, %s125
      %s128 = sphi 0, %s127
      %s142 = sphi 0, %s128
      %s146 = sphi 0, %s146
      %s148 = sphi 0, %s146
      %s149 = sphi 0, %s148
      %s163 = sphi 0, %s149
      %s169 = sphi 0, %s171
      %s172 = sphi 0, %s169
      %s173 = sphi 0, %s172
      %s189 = sphi 0, %s173
    $region4: #{tpu_custom_call.1} parent=1 // loop_header_branch
      %19 = sbr.rel (%p17) target = $region8
    $region5: #{tpu_custom_call.1} parent=1 // loop_body
      %s21 = ssub.s32 %s16, 1
      %s22 = ssub.s32 %s16, 2
      %s29 = sadd.s32 1, %s24
      %p30 = scmp.ge.s32.totalorder %s29, 1
      %s31 = scalar_select %p30, 0, %s29
      %s32 = sadd.s32 1, %s23
      %s33 = scalar_select %p30, %s32, %s23
      %p34 = scmp.ge.s32.totalorder %s33, 2
      %s35 = scalar_select %p34, 0, %s33
      %s36 = ssub.s32 %s24, %s31
      %p37 = scmp.eq.s32.totalorder %s36, 0
      %s39 = sadd.s32 %s38, 1
      %s40 = scalar_select %p37, %s38, %s39
      %p43 = pneg %p37
      %p44 = scmp.eq.s32.totalorder %s16, 1
      %p45 = por %p43, %p44
      %p46 = scmp.ne.s32.totalorder %s38, %s41
      %p47 = scmp.eq.s32.totalorder %s16, 0
      %p48 = por %p46, %p47
      %p49 = scmp.ne.s32.totalorder %s38, %s41
      %p50 = scmp.eq.s32.totalorder %s21, 1
      %p51 = por %p49, %p50
      %p52 = scmp.ne.s32.totalorder %s41, %s42
      %p53 = scmp.eq.s32.totalorder %s21, 0
      %p54 = por %p52, %p53
      %p55 = scmp.ne.s32.totalorder %s41, %s42
      %p56 = scmp.eq.s32.totalorder %s22, 1
      %p57 = por %p55, %p56
      %p59 = scmp.ne.s32.totalorder %s42, %s58
      %p60 = scmp.eq.s32.totalorder %s22, 0
      %p61 = por %p59, %p60
      %s63 = sadd.s32 %s62, 1
      %p66 = scmp.eq.s32.totalorder %s16, 1
      %p67 = scmp.ne.s32.totalorder %s62, %s64
      %p68 = scmp.eq.s32.totalorder %s16, 0
      %p69 = por %p67, %p68
      %p70 = scmp.ne.s32.totalorder %s62, %s64
      %p71 = scmp.eq.s32.totalorder %s21, 1
      %p72 = por %p70, %p71
      %p73 = scmp.ne.s32.totalorder %s64, %s65
      %p74 = scmp.eq.s32.totalorder %s21, 0
      %p75 = por %p73, %p74
      %p76 = scmp.ne.s32.totalorder %s64, %s65
      %p77 = scmp.eq.s32.totalorder %s22, 1
      %p78 = por %p76, %p77
      %p80 = scmp.ne.s32.totalorder %s65, %s79
      %p81 = scmp.eq.s32.totalorder %s22, 0
      %p82 = por %p80, %p81
      %s84 = sadd.s32 %s83, 1
      %p87 = scmp.eq.s32.totalorder %s16, 1
      %p88 = scmp.ne.s32.totalorder %s83, %s85
      %p89 = scmp.eq.s32.totalorder %s16, 0
      %p90 = por %p88, %p89
      %p91 = scmp.ne.s32.totalorder %s83, %s85
      %p92 = scmp.eq.s32.totalorder %s21, 1
      %p93 = por %p91, %p92
      %p94 = scmp.ne.s32.totalorder %s85, %s86
      %p95 = scmp.eq.s32.totalorder %s21, 0
      %p96 = por %p94, %p95
      %p97 = scmp.ne.s32.totalorder %s85, %s86
      %p98 = scmp.eq.s32.totalorder %s22, 1
      %p99 = por %p97, %p98
      %p101 = scmp.ne.s32.totalorder %s86, %s100
      %p102 = scmp.eq.s32.totalorder %s22, 0
      %p103 = por %p101, %p102
      %s105 = sadd.s32 %s104, 1
      %p108 = scmp.eq.s32.totalorder %s16, 1
      %p109 = scmp.ne.s32.totalorder %s104, %s106
      %p110 = scmp.eq.s32.totalorder %s16, 0
      %p111 = por %p109, %p110
      %p112 = scmp.ne.s32.totalorder %s104, %s106
      %p113 = scmp.eq.s32.totalorder %s21, 1
      %p114 = por %p112, %p113
      %p115 = scmp.ne.s32.totalorder %s106, %s107
      %p116 = scmp.eq.s32.totalorder %s21, 0
      %p117 = por %p115, %p116
      %p118 = scmp.ne.s32.totalorder %s106, %s107
      %p119 = scmp.eq.s32.totalorder %s22, 1
      %p120 = por %p118, %p119
      %p122 = scmp.ne.s32.totalorder %s107, %s121
      %p123 = scmp.eq.s32.totalorder %s22, 0
      %p124 = por %p122, %p123
      %s126 = sadd.s32 %s125, 1
      %p129 = scmp.eq.s32.totalorder %s16, 1
      %p130 = scmp.ne.s32.totalorder %s125, %s127
      %p131 = scmp.eq.s32.totalorder %s16, 0
      %p132 = por %p130, %p131
      %p133 = scmp.ne.s32.totalorder %s125, %s127
      %p134 = scmp.eq.s32.totalorder %s21, 1
      %p135 = por %p133, %p134
      %p136 = scmp.ne.s32.totalorder %s127, %s128
      %p137 = scmp.eq.s32.totalorder %s21, 0
      %p138 = por %p136, %p137
      %p139 = scmp.ne.s32.totalorder %s127, %s128
      %p140 = scmp.eq.s32.totalorder %s22, 1
      %p141 = por %p139, %p140
      %p143 = scmp.ne.s32.totalorder %s128, %s142
      %p144 = scmp.eq.s32.totalorder %s22, 0
      %p145 = por %p143, %p144
      %s147 = sadd.s32 %s146, 1
      %p150 = scmp.eq.s32.totalorder %s16, 1
      %p151 = scmp.ne.s32.totalorder %s146, %s148
      %p152 = scmp.eq.s32.totalorder %s16, 0
      %p153 = por %p151, %p152
      %p154 = scmp.ne.s32.totalorder %s146, %s148
      %p155 = scmp.eq.s32.totalorder %s21, 1
      %p156 = por %p154, %p155
      %p157 = scmp.ne.s32.totalorder %s148, %s149
      %p158 = scmp.eq.s32.totalorder %s21, 0
      %p159 = por %p157, %p158
      %p160 = scmp.ne.s32.totalorder %s148, %s149
      %p161 = scmp.eq.s32.totalorder %s22, 1
      %p162 = por %p160, %p161
      %p164 = scmp.ne.s32.totalorder %s149, %s163
      %p165 = scmp.eq.s32.totalorder %s22, 0
      %p166 = por %p164, %p165
      %s167 = ssub.s32 %s24, %s31
      %p168 = scmp.eq.s32.totalorder %s167, 0
      %s170 = sadd.s32 %s169, 1
      %s171 = scalar_select %p168, %s169, %s170
      %p174 = pneg %p168
      %p175 = scmp.eq.s32.totalorder %s16, 1
      %p176 = por %p174, %p175
      %p177 = scmp.ne.s32.totalorder %s169, %s172
      %p178 = scmp.eq.s32.totalorder %s16, 0
      %p179 = por %p177, %p178
      %p180 = scmp.ne.s32.totalorder %s169, %s172
      %p181 = scmp.eq.s32.totalorder %s21, 1
      %p182 = por %p180, %p181
      %p183 = scmp.ne.s32.totalorder %s172, %s173
      %p184 = scmp.eq.s32.totalorder %s21, 0
      %p185 = por %p183, %p184
      %p186 = scmp.ne.s32.totalorder %s172, %s173
      %p187 = scmp.eq.s32.totalorder %s22, 1
      %p188 = por %p186, %p187
      %p190 = scmp.ne.s32.totalorder %s173, %s189
      %p191 = scmp.eq.s32.totalorder %s22, 0
      %p192 = por %p190, %p191
      %p193 = scmp.le.s32.totalorder 1, %s16
      %p194 = scmp.lt.s32.totalorder %s16, 3
      %p195 = pnand %p193, %p194
      %p196 = pneg %p195
      // Predicated region
      $region9: #{tpu_custom_call.1} parent=5 // pred_check
        _
      $region10: #{tpu_custom_call.1} parent=5 // pred_check_branch
        %198 = sbr.rel (%p195) target = $region12
      $region11: #{tpu_custom_call.1} parent=5 // pred_region
        %s199 = ssub.s32 %s16, 1
        // Predicated region
        $region13: #{tpu_custom_call.1} parent=11 // pred_check
          %p200 = pneg %p54
        $region14: #{tpu_custom_call.1} parent=11 // pred_check_branch
          %202 = sbr.rel (%p200) target = $region16
        $region15: #{tpu_custom_call.1} parent=11 // pred_region
          %s203 = smul.u32 8, %s26
          %s205 = ssub.s32 512, 512
          %206 = vsyncadd [#allocation5], %s205
          %s207 = smul.addr %s203, 64
          %s208 = scalar_lea.hbm %s0, %s207
          %s209 = sshll.u32 [#allocation4], 4
          %s210 = int_to_ptr.vmem [resolvable:$true] %s209
          %215 = dma.hbm_to_vmem [thread:$0]  %s208, 512, %s210, [#allocation5], 64, 64, 4
        $region16: #{tpu_custom_call.1} parent=11 // pred_fallthru
          _
        // Predicated region
        $region17: #{tpu_custom_call.1} parent=11 // pred_check
          %p216 = pneg %p75
        $region18: #{tpu_custom_call.1} parent=11 // pred_check_branch
          %218 = sbr.rel (%p216) target = $region20
        $region19: #{tpu_custom_call.1} parent=11 // pred_region
          %s220 = ssub.s32 512, 512
          %221 = vsyncadd [#allocation8], %s220
          %s222 = sshll.u32 [#allocation7], 4
          %s223 = int_to_ptr.vmem [resolvable:$true] %s222
          %228 = dma.hbm_to_vmem [thread:$0]  %s1, 512, %s223, [#allocation8], 64, 64, 4
        $region20: #{tpu_custom_call.1} parent=11 // pred_fallthru
          _
        // Predicated region
        $region21: #{tpu_custom_call.1} parent=11 // pred_check
          %p229 = pneg %p96
        $region22: #{tpu_custom_call.1} parent=11 // pred_check_branch
          %231 = sbr.rel (%p229) target = $region24
        $region23: #{tpu_custom_call.1} parent=11 // pred_region
          %s233 = ssub.s32 1024, 1024
          %234 = vsyncadd [#allocation8], %s233
          %s235 = sshll.u32 [#allocation9], 4
          %s236 = int_to_ptr.vmem [resolvable:$true] %s235
          %241 = dma.hbm_to_vmem [thread:$0]  %s2, 1024, %s236, [#allocation8], 64, 64, 4
        $region24: #{tpu_custom_call.1} parent=11 // pred_fallthru
          _
        // Predicated region
        $region25: #{tpu_custom_call.1} parent=11 // pred_check
          %p242 = pneg %p117
        $region26: #{tpu_custom_call.1} parent=11 // pred_check_branch
          %244 = sbr.rel (%p242) target = $region28
        $region27: #{tpu_custom_call.1} parent=11 // pred_region
          %s246 = ssub.s32 1024, 1024
          %247 = vsyncadd [#allocation11], %s246
          %s248 = sshll.u32 [#allocation10], 4
          %s249 = int_to_ptr.vmem [resolvable:$true] %s248
          %254 = dma.hbm_to_vmem [thread:$0]  %s3, 1024, %s249, [#allocation11], 64, 64, 4
        $region28: #{tpu_custom_call.1} parent=11 // pred_fallthru
          _
        // Predicated region
        $region29: #{tpu_custom_call.1} parent=11 // pred_check
          %p255 = pneg %p138
        $region30: #{tpu_custom_call.1} parent=11 // pred_check_branch
          %257 = sbr.rel (%p255) target = $region32
        $region31: #{tpu_custom_call.1} parent=11 // pred_region
          _
        $region32: #{tpu_custom_call.1} parent=11 // pred_fallthru
          _
        // Predicated region
        $region33: #{tpu_custom_call.1} parent=11 // pred_check
          %p258 = pneg %p159
        $region34: #{tpu_custom_call.1} parent=11 // pred_check_branch
          %260 = sbr.rel (%p258) target = $region36
        $region35: #{tpu_custom_call.1} parent=11 // pred_region
          _
        $region36: #{tpu_custom_call.1} parent=11 // pred_fallthru
          _
      $region12: #{tpu_custom_call.1} parent=5 // pred_fallthru
        _
      %p261 = scmp.lt.s32.totalorder %s16, 2
      // Predicated region
      $region37: #{tpu_custom_call.1} parent=5 // pred_check
        %p262 = pneg %p261
      $region38: #{tpu_custom_call.1} parent=5 // pred_check_branch
        %264 = sbr.rel (%p262) target = $region40
      $region39: #{tpu_custom_call.1} parent=5 // pred_region
        _
      $region40: #{tpu_custom_call.1} parent=5 // pred_fallthru
        _
      %p265 = scmp.le.s32.totalorder 1, %s16
      %p266 = scmp.lt.s32.totalorder %s16, 3
      %p267 = pnand %p265, %p266
      %p268 = pneg %p267
      // Predicated region
      $region41: #{tpu_custom_call.1} parent=5 // pred_check
        _
      $region42: #{tpu_custom_call.1} parent=5 // pred_check_branch
        %270 = sbr.rel (%p267) target = $region44
      $region43: #{tpu_custom_call.1} parent=5 // pred_region
        %s271 = ssub.s32 %s16, 1
        // Predicated region
        $region45: #{tpu_custom_call.1} parent=43 // pred_check
          %p272 = pneg %p54
        $region46: #{tpu_custom_call.1} parent=43 // pred_check_branch
          %274 = sbr.rel (%p272) target = $region48
        $region47: #{tpu_custom_call.1} parent=43 // pred_region
          %275 = dma.done [#allocation5], 512
        $region48: #{tpu_custom_call.1} parent=43 // pred_fallthru
          _
        // Predicated region
        $region49: #{tpu_custom_call.1} parent=43 // pred_check
          %p276 = pneg %p75
        $region50: #{tpu_custom_call.1} parent=43 // pred_check_branch
          %278 = sbr.rel (%p276) target = $region52
        $region51: #{tpu_custom_call.1} parent=43 // pred_region
          %279 = dma.done [#allocation8], 512
        $region52: #{tpu_custom_call.1} parent=43 // pred_fallthru
          _
        // Predicated region
        $region53: #{tpu_custom_call.1} parent=43 // pred_check
          %p280 = pneg %p96
        $region54: #{tpu_custom_call.1} parent=43 // pred_check_branch
          %282 = sbr.rel (%p280) target = $region56
        $region55: #{tpu_custom_call.1} parent=43 // pred_region
          %283 = dma.done [#allocation8], 1024
        $region56: #{tpu_custom_call.1} parent=43 // pred_fallthru
          _
        // Predicated region
        $region57: #{tpu_custom_call.1} parent=43 // pred_check
          %p284 = pneg %p117
        $region58: #{tpu_custom_call.1} parent=43 // pred_check_branch
          %286 = sbr.rel (%p284) target = $region60
        $region59: #{tpu_custom_call.1} parent=43 // pred_region
          %287 = dma.done [#allocation11], 1024
        $region60: #{tpu_custom_call.1} parent=43 // pred_fallthru
          _
        %p288 = pneg %p54
        %p289 = pneg %p51
        %p290 = pneg %p75
        %p291 = pneg %p72
        %p292 = pneg %p96
        %p293 = pneg %p93
        %p294 = pneg %p117
        %p295 = pneg %p114
        %p296 = pneg %p138
        %p297 = pneg %p135
        %p298 = pneg %p159
        %p299 = pneg %p156
        %p300 = pneg %p185
        %p301 = pneg %p182
        %s302 = smul.u32 8, %s26
        %s303 = smul.u32 8, %s26
        %p305 = scmp.eq.s32.totalorder %s25, 0
        %p306 = scmp.eq.s32.totalorder %s26, 0
        %p307 = pnand %p305, %p306
        %p308 = pneg %p307
        // Predicated region
        $region61: #{tpu_custom_call.1} parent=43 // pred_check
          _
        $region62: #{tpu_custom_call.1} parent=43 // pred_check_branch
          %310 = sbr.rel (%p307) target = $region64
        $region63: #{tpu_custom_call.1} parent=43 // pred_region
          %v311 = vld [vmem:[#allocation7] sm:$0xf]
          %v312 = vld [vmem:[#allocation7 + $0x4] sm:$0xf]
          %v313 = vld [vmem:[#allocation7 + $0x8] sm:$0xf]
          %v314 = vld [vmem:[#allocation7 + $0xc] sm:$0xf]
          %v315 = vld [vmem:[#allocation7 + $0x10] sm:$0xf]
          %v316 = vld [vmem:[#allocation7 + $0x14] sm:$0xf]
          %v317 = vld [vmem:[#allocation7 + $0x18] sm:$0xf]
          %v318 = vld [vmem:[#allocation7 + $0x1c] sm:$0xf]
          %v319 = vld [vmem:[#allocation9] sm:$0xf]
          %v320 = vld [vmem:[#allocation9 + $0x4] sm:$0xf]
          %v321 = vld [vmem:[#allocation9 + $0x8] sm:$0xf]
          %v322 = vld [vmem:[#allocation9 + $0xc] sm:$0xf]
          %v323 = vld [vmem:[#allocation9 + $0x10] sm:$0xf]
          %v324 = vld [vmem:[#allocation9 + $0x14] sm:$0xf]
          %v325 = vld [vmem:[#allocation9 + $0x18] sm:$0xf]
          %v326 = vld [vmem:[#allocation9 + $0x1c] sm:$0xf]
          %v327 = vld [vmem:[#allocation9 + $0x20] sm:$0xf]
          %v328 = vld [vmem:[#allocation9 + $0x24] sm:$0xf]
          %v329 = vld [vmem:[#allocation9 + $0x28] sm:$0xf]
          %v330 = vld [vmem:[#allocation9 + $0x2c] sm:$0xf]
          %v331 = vld [vmem:[#allocation9 + $0x30] sm:$0xf]
          %v332 = vld [vmem:[#allocation9 + $0x34] sm:$0xf]
          %v333 = vld [vmem:[#allocation9 + $0x38] sm:$0xf]
          %v334 = vld [vmem:[#allocation9 + $0x3c] sm:$0xf]
          %v343 = vunpack.c.l.b16 %v311
          %v344 = vunpack.c.l.b16 %v312
          %v345 = vunpack.c.l.b16 %v313
          %v346 = vunpack.c.l.b16 %v314
          %v347 = vunpack.c.l.b16 %v315
          %v348 = vunpack.c.l.b16 %v316
          %v349 = vunpack.c.l.b16 %v317
          %v350 = vunpack.c.l.b16 %v318
          %v351 = vpack.c.b16 %v344, %v343
          %v352 = vpack.c.b16 %v346, %v345
          %v353 = vpack.c.b16 %v348, %v347
          %v354 = vpack.c.b16 %v350, %v349
          %v375 = vunpack.c.l.b16 %v319
          %v376 = vunpack.c.l.b16 %v320
          %v377 = vunpack.c.l.b16 %v321
          %v378 = vunpack.c.l.b16 %v322
          %v379 = vunpack.c.l.b16 %v323
          %v380 = vunpack.c.l.b16 %v324
          %v381 = vunpack.c.l.b16 %v325
          %v382 = vunpack.c.l.b16 %v326
          %v383 = vunpack.c.l.b16 %v327
          %v384 = vunpack.c.l.b16 %v328
          %v385 = vunpack.c.l.b16 %v329
          %v386 = vunpack.c.l.b16 %v330
          %v387 = vunpack.c.l.b16 %v331
          %v388 = vunpack.c.l.b16 %v332
          %v389 = vunpack.c.l.b16 %v333
          %v390 = vunpack.c.l.b16 %v334
          %v391 = vpack.c.b16 %v376, %v375
          %v392 = vpack.c.b16 %v378, %v377
          %v393 = vpack.c.b16 %v380, %v379
          %v394 = vpack.c.b16 %v382, %v381
          %v395 = vpack.c.b16 %v384, %v383
          %v396 = vpack.c.b16 %v386, %v385
          %v397 = vpack.c.b16 %v388, %v387
          %v398 = vpack.c.b16 %v390, %v389
          %407 = vmatprep.subr.bf16.mxu0 0
          %408 = vmatpush1.bf16.msra.mxu0 %v398
          %409 = vmatprep.subr.bf16.mxu0 0
          %410 = vmatpush1.bf16.msra.mxu0 %v397
          %411 = vmatprep.subr.bf16.mxu0 0
          %412 = vmatpush1.bf16.msra.mxu0 %v396
          %413 = vmatprep.subr.bf16.mxu0 0
          %414 = vmatpush1.bf16.msra.mxu0 %v395
          %415 = vmatprep.subr.bf16.mxu0 0
          %416 = vmatpush1.bf16.msra.mxu0 %v394
          %417 = vmatprep.subr.bf16.mxu0 0
          %418 = vmatpush1.bf16.msra.mxu0 %v393
          %419 = vmatprep.subr.bf16.mxu0 0
          %420 = vmatpush1.bf16.msra.mxu0 %v392
          %421 = vmatprep.subr.bf16.mxu0 0
          %422 = vmatpush1.bf16.msra.mxu0 %v391
          %423 = vmatprep.subr.bf16.mxu0 0
          %424 = vmatpush2.bf16.msra.mxu0 0
          %425 = vmatprep.subr.bf16.mxu0 0
          %426 = vmatpush2.bf16.msra.mxu0 0
          %427 = vmatprep.subr.bf16.mxu0 0
          %428 = vmatpush2.bf16.msra.mxu0 0
          %429 = vmatprep.subr.bf16.mxu0 0
          %430 = vmatpush2.bf16.msra.mxu0 0
          %431 = vmatprep.subr.bf16.mxu0 0
          %432 = vmatpush2.bf16.msra.mxu0 0
          %433 = vmatprep.subr.bf16.mxu0 0
          %434 = vmatpush2.bf16.msra.mxu0 0
          %435 = vmatprep.subr.bf16.mxu0 0
          %436 = vmatpush2.bf16.msra.mxu0 0
          %437 = vmatprep.subr.bf16.mxu0 0
          %438 = vmatpush2.bf16.msra.mxu0 0
          %439 = vmatprep.mubr.bf16.mxu0 0
          %440 = vmatmul.mubr.bf16.gmra.mxu0 %v351
          %v441 = vpop.f32.mrf.mxu0
          %v442 = vadd.f32 0.0, %v441
          %v443 = vpop.f32.mrf.mxu0
          %v444 = vpop.f32.mrf.mxu0
          %v445 = vadd.f32 0.0, %v444
          %v446 = vpop.f32.mrf.mxu0
          %447 = vmatprep.mubr.bf16.mxu0 0
          %448 = vmatmul.mubr.bf16.gmra.mxu0 %v352
          %v449 = vpop.f32.mrf.mxu0
          %v450 = vadd.f32 0.0, %v449
          %v451 = vpop.f32.mrf.mxu0
          %v452 = vpop.f32.mrf.mxu0
          %v453 = vadd.f32 0.0, %v452
          %v454 = vpop.f32.mrf.mxu0
          %455 = vmatprep.mubr.bf16.mxu0 0
          %456 = vmatmul.mubr.bf16.gmra.mxu0 %v353
          %v457 = vpop.f32.mrf.mxu0
          %v458 = vadd.f32 0.0, %v457
          %v459 = vpop.f32.mrf.mxu0
          %v460 = vpop.f32.mrf.mxu0
          %v461 = vadd.f32 0.0, %v460
          %v462 = vpop.f32.mrf.mxu0
          %463 = vmatprep.mubr.bf16.mxu0 0
          %464 = vmatmul.mubr.bf16.gmra.mxu0 %v354
          %v465 = vpop.f32.mrf.mxu0
          %v466 = vadd.f32 0.0, %v465
          %v467 = vpop.f32.mrf.mxu0
          %v468 = vpop.f32.mrf.mxu0
          %v469 = vadd.f32 0.0, %v468
          %v470 = vpop.f32.mrf.mxu0
          %471 = vdwg.mxu0
          %v472 = vpack.c.bf16 %v445, %v442
          %v473 = vpack.c.bf16 %v453, %v450
          %v474 = vpack.c.bf16 %v461, %v458
          %v475 = vpack.c.bf16 %v469, %v466
          %v480 = vunpack.c.l.b16 %v472
          %v481 = vunpack.c.h.b16 %v472
          %v482 = vunpack.c.l.b16 %v473
          %v483 = vunpack.c.h.b16 %v473
          %v484 = vunpack.c.l.b16 %v474
          %v485 = vunpack.c.h.b16 %v474
          %v486 = vunpack.c.l.b16 %v475
          %v487 = vunpack.c.h.b16 %v475
          %v488 = vpack.c.b16 %v480, %v480
          %v489 = vpack.c.b16 %v481, %v481
          %v490 = vpack.c.b16 %v482, %v482
          %v491 = vpack.c.b16 %v483, %v483
          %v492 = vpack.c.b16 %v484, %v484
          %v493 = vpack.c.b16 %v485, %v485
          %v494 = vpack.c.b16 %v486, %v486
          %v495 = vpack.c.b16 %v487, %v487
          %504 = vst [vmem:[#allocation2] sm:$0xf] %v488
          %505 = vst [vmem:[#allocation2 + $0x4] sm:$0xf] %v489
          %506 = vst [vmem:[#allocation2 + $0x8] sm:$0xf] %v490
          %507 = vst [vmem:[#allocation2 + $0xc] sm:$0xf] %v491
          %508 = vst [vmem:[#allocation2 + $0x10] sm:$0xf] %v492
          %509 = vst [vmem:[#allocation2 + $0x14] sm:$0xf] %v493
          %510 = vst [vmem:[#allocation2 + $0x18] sm:$0xf] %v494
          %511 = vst [vmem:[#allocation2 + $0x1c] sm:$0xf] %v495
        $region64: #{tpu_custom_call.1} parent=43 // pred_fallthru
          _
        %p512 = scmp.eq.s32.totalorder %s25, 1
        %p513 = pnand %p512, %p306
        %p514 = pneg %p513
        // Predicated region
        $region65: #{tpu_custom_call.1} parent=43 // pred_check
          _
        $region66: #{tpu_custom_call.1} parent=43 // pred_check_branch
          %516 = sbr.rel (%p513) target = $region68
        $region67: #{tpu_custom_call.1} parent=43 // pred_region
          %v517 = vld [vmem:[#allocation3] sm:$0xf]
          %v518 = vld [vmem:[#allocation3 + $0x4] sm:$0xf]
          %v519 = vld [vmem:[#allocation3 + $0x8] sm:$0xf]
          %v520 = vld [vmem:[#allocation3 + $0xc] sm:$0xf]
          %v521 = vld [vmem:[#allocation3 + $0x10] sm:$0xf]
          %v522 = vld [vmem:[#allocation3 + $0x14] sm:$0xf]
          %v523 = vld [vmem:[#allocation3 + $0x18] sm:$0xf]
          %v524 = vld [vmem:[#allocation3 + $0x1c] sm:$0xf]
          %v525 = vld [vmem:[#allocation10] sm:$0xf]
          %v526 = vld [vmem:[#allocation10 + $0x4] sm:$0xf]
          %v527 = vld [vmem:[#allocation10 + $0x8] sm:$0xf]
          %v528 = vld [vmem:[#allocation10 + $0xc] sm:$0xf]
          %v529 = vld [vmem:[#allocation10 + $0x10] sm:$0xf]
          %v530 = vld [vmem:[#allocation10 + $0x14] sm:$0xf]
          %v531 = vld [vmem:[#allocation10 + $0x18] sm:$0xf]
          %v532 = vld [vmem:[#allocation10 + $0x1c] sm:$0xf]
          %v533 = vld [vmem:[#allocation10 + $0x20] sm:$0xf]
          %v534 = vld [vmem:[#allocation10 + $0x24] sm:$0xf]
          %v535 = vld [vmem:[#allocation10 + $0x28] sm:$0xf]
          %v536 = vld [vmem:[#allocation10 + $0x2c] sm:$0xf]
          %v537 = vld [vmem:[#allocation10 + $0x30] sm:$0xf]
          %v538 = vld [vmem:[#allocation10 + $0x34] sm:$0xf]
          %v539 = vld [vmem:[#allocation10 + $0x38] sm:$0xf]
          %v540 = vld [vmem:[#allocation10 + $0x3c] sm:$0xf]
          %v549 = vunpack.c.l.b16 %v517
          %v550 = vunpack.c.l.b16 %v518
          %v551 = vunpack.c.l.b16 %v519
          %v552 = vunpack.c.l.b16 %v520
          %v553 = vunpack.c.l.b16 %v521
          %v554 = vunpack.c.l.b16 %v522
          %v555 = vunpack.c.l.b16 %v523
          %v556 = vunpack.c.l.b16 %v524
          %v557 = vpack.c.b16 %v550, %v549
          %v558 = vpack.c.b16 %v552, %v551
          %v559 = vpack.c.b16 %v554, %v553
          %v560 = vpack.c.b16 %v556, %v555
          %v581 = vunpack.c.l.b16 %v525
          %v582 = vunpack.c.l.b16 %v526
          %v583 = vunpack.c.l.b16 %v527
          %v584 = vunpack.c.l.b16 %v528
          %v585 = vunpack.c.l.b16 %v529
          %v586 = vunpack.c.l.b16 %v530
          %v587 = vunpack.c.l.b16 %v531
          %v588 = vunpack.c.l.b16 %v532
          %v589 = vunpack.c.l.b16 %v533
          %v590 = vunpack.c.l.b16 %v534
          %v591 = vunpack.c.l.b16 %v535
          %v592 = vunpack.c.l.b16 %v536
          %v593 = vunpack.c.l.b16 %v537
          %v594 = vunpack.c.l.b16 %v538
          %v595 = vunpack.c.l.b16 %v539
          %v596 = vunpack.c.l.b16 %v540
          %v597 = vpack.c.b16 %v582, %v581
          %v598 = vpack.c.b16 %v584, %v583
          %v599 = vpack.c.b16 %v586, %v585
          %v600 = vpack.c.b16 %v588, %v587
          %v601 = vpack.c.b16 %v590, %v589
          %v602 = vpack.c.b16 %v592, %v591
          %v603 = vpack.c.b16 %v594, %v593
          %v604 = vpack.c.b16 %v596, %v595
          %613 = vmatprep.subr.bf16.mxu0 0
          %614 = vmatpush1.bf16.msra.mxu0 %v604
          %615 = vmatprep.subr.bf16.mxu0 0
          %616 = vmatpush1.bf16.msra.mxu0 %v603
          %617 = vmatprep.subr.bf16.mxu0 0
          %618 = vmatpush1.bf16.msra.mxu0 %v602
          %619 = vmatprep.subr.bf16.mxu0 0
          %620 = vmatpush1.bf16.msra.mxu0 %v601
          %621 = vmatprep.subr.bf16.mxu0 0
          %622 = vmatpush1.bf16.msra.mxu0 %v600
          %623 = vmatprep.subr.bf16.mxu0 0
          %624 = vmatpush1.bf16.msra.mxu0 %v599
          %625 = vmatprep.subr.bf16.mxu0 0
          %626 = vmatpush1.bf16.msra.mxu0 %v598
          %627 = vmatprep.subr.bf16.mxu0 0
          %628 = vmatpush1.bf16.msra.mxu0 %v597
          %629 = vmatprep.subr.bf16.mxu0 0
          %630 = vmatpush2.bf16.msra.mxu0 0
          %631 = vmatprep.subr.bf16.mxu0 0
          %632 = vmatpush2.bf16.msra.mxu0 0
          %633 = vmatprep.subr.bf16.mxu0 0
          %634 = vmatpush2.bf16.msra.mxu0 0
          %635 = vmatprep.subr.bf16.mxu0 0
          %636 = vmatpush2.bf16.msra.mxu0 0
          %637 = vmatprep.subr.bf16.mxu0 0
          %638 = vmatpush2.bf16.msra.mxu0 0
          %639 = vmatprep.subr.bf16.mxu0 0
          %640 = vmatpush2.bf16.msra.mxu0 0
          %641 = vmatprep.subr.bf16.mxu0 0
          %642 = vmatpush2.bf16.msra.mxu0 0
          %643 = vmatprep.subr.bf16.mxu0 0
          %644 = vmatpush2.bf16.msra.mxu0 0
          %645 = vmatprep.mubr.bf16.mxu0 0
          %646 = vmatmul.mubr.bf16.gmra.mxu0 %v557
          %v647 = vpop.f32.mrf.mxu0
          %v648 = vadd.f32 0.0, %v647
          %v649 = vpop.f32.mrf.mxu0
          %v650 = vpop.f32.mrf.mxu0
          %v651 = vadd.f32 0.0, %v650
          %v652 = vpop.f32.mrf.mxu0
          %653 = vmatprep.mubr.bf16.mxu0 0
          %654 = vmatmul.mubr.bf16.gmra.mxu0 %v558
          %v655 = vpop.f32.mrf.mxu0
          %v656 = vadd.f32 0.0, %v655
          %v657 = vpop.f32.mrf.mxu0
          %v658 = vpop.f32.mrf.mxu0
          %v659 = vadd.f32 0.0, %v658
          %v660 = vpop.f32.mrf.mxu0
          %661 = vmatprep.mubr.bf16.mxu0 0
          %662 = vmatmul.mubr.bf16.gmra.mxu0 %v559
          %v663 = vpop.f32.mrf.mxu0
          %v664 = vadd.f32 0.0, %v663
          %v665 = vpop.f32.mrf.mxu0
          %v666 = vpop.f32.mrf.mxu0
          %v667 = vadd.f32 0.0, %v666
          %v668 = vpop.f32.mrf.mxu0
          %669 = vmatprep.mubr.bf16.mxu0 0
          %670 = vmatmul.mubr.bf16.gmra.mxu0 %v560
          %v671 = vpop.f32.mrf.mxu0
          %v672 = vadd.f32 0.0, %v671
          %v673 = vpop.f32.mrf.mxu0
          %v674 = vpop.f32.mrf.mxu0
          %v675 = vadd.f32 0.0, %v674
          %v676 = vpop.f32.mrf.mxu0
          %677 = vdwg.mxu0
          %v678 = vpack.c.bf16 %v651, %v648
          %v679 = vpack.c.bf16 %v659, %v656
          %v680 = vpack.c.bf16 %v667, %v664
          %v681 = vpack.c.bf16 %v675, %v672
          %v686 = vunpack.c.l.b16 %v678
          %v687 = vunpack.c.h.b16 %v678
          %v688 = vunpack.c.l.b16 %v679
          %v689 = vunpack.c.h.b16 %v679
          %v690 = vunpack.c.l.b16 %v680
          %v691 = vunpack.c.h.b16 %v680
          %v692 = vunpack.c.l.b16 %v681
          %v693 = vunpack.c.h.b16 %v681
          %v694 = vpack.c.b16 %v686, %v686
          %v695 = vpack.c.b16 %v687, %v687
          %v696 = vpack.c.b16 %v688, %v688
          %v697 = vpack.c.b16 %v689, %v689
          %v698 = vpack.c.b16 %v690, %v690
          %v699 = vpack.c.b16 %v691, %v691
          %v700 = vpack.c.b16 %v692, %v692
          %v701 = vpack.c.b16 %v693, %v693
          %710 = vst [vmem:[#allocation2] sm:$0xf] %v694
          %711 = vst [vmem:[#allocation2 + $0x4] sm:$0xf] %v695
          %712 = vst [vmem:[#allocation2 + $0x8] sm:$0xf] %v696
          %713 = vst [vmem:[#allocation2 + $0xc] sm:$0xf] %v697
          %714 = vst [vmem:[#allocation2 + $0x10] sm:$0xf] %v698
          %715 = vst [vmem:[#allocation2 + $0x14] sm:$0xf] %v699
          %716 = vst [vmem:[#allocation2 + $0x18] sm:$0xf] %v700
          %717 = vst [vmem:[#allocation2 + $0x1c] sm:$0xf] %v701
        $region68: #{tpu_custom_call.1} parent=43 // pred_fallthru
          _
        %v718 = vld [vmem:[#allocation4] sm:$0xf]
        %v719 = vld [vmem:[#allocation4 + $0x4] sm:$0xf]
        %v720 = vld [vmem:[#allocation4 + $0x8] sm:$0xf]
        %v721 = vld [vmem:[#allocation4 + $0xc] sm:$0xf]
        %v722 = vld [vmem:[#allocation4 + $0x10] sm:$0xf]
        %v723 = vld [vmem:[#allocation4 + $0x14] sm:$0xf]
        %v724 = vld [vmem:[#allocation4 + $0x18] sm:$0xf]
        %v725 = vld [vmem:[#allocation4 + $0x1c] sm:$0xf]
        %v726 = vld [vmem:[#allocation2] sm:$0xf]
        %v727 = vld [vmem:[#allocation2 + $0x4] sm:$0xf]
        %v728 = vld [vmem:[#allocation2 + $0x8] sm:$0xf]
        %v729 = vld [vmem:[#allocation2 + $0xc] sm:$0xf]
        %v730 = vld [vmem:[#allocation2 + $0x10] sm:$0xf]
        %v731 = vld [vmem:[#allocation2 + $0x14] sm:$0xf]
        %v732 = vld [vmem:[#allocation2 + $0x18] sm:$0xf]
        %v733 = vld [vmem:[#allocation2 + $0x1c] sm:$0xf]
        %v742 = vunpack.c.l.b16 %v718
        %v743 = vunpack.c.l.b16 %v719
        %v744 = vunpack.c.l.b16 %v720
        %v745 = vunpack.c.l.b16 %v721
        %v746 = vunpack.c.l.b16 %v722
        %v747 = vunpack.c.l.b16 %v723
        %v748 = vunpack.c.l.b16 %v724
        %v749 = vunpack.c.l.b16 %v725
        %v750 = vpack.c.b16 %v743, %v742
        %v751 = vpack.c.b16 %v745, %v744
        %v752 = vpack.c.b16 %v747, %v746
        %v753 = vpack.c.b16 %v749, %v748
        %v762 = vunpack.c.l.b16 %v726
        %v763 = vunpack.c.l.b16 %v727
        %v764 = vunpack.c.l.b16 %v728
        %v765 = vunpack.c.l.b16 %v729
        %v766 = vunpack.c.l.b16 %v730
        %v767 = vunpack.c.l.b16 %v731
        %v768 = vunpack.c.l.b16 %v732
        %v769 = vunpack.c.l.b16 %v733
        %v770 = vpack.c.b16 %v763, %v762
        %v771 = vpack.c.b16 %v765, %v764
        %v772 = vpack.c.b16 %v767, %v766
        %v773 = vpack.c.b16 %v769, %v768
        %vm778 = vcmask 523264
        %v780 = vsel %vm778, %v750, 0
        %v783 = vsel %vm778, %v751, 0
        %v786 = vsel %vm778, %v752, 0
        %v789 = vsel %vm778, %v753, 0
        %791 = vmatprep.subr.bf16.mxu0 0
        %792 = vmatpush1.bf16.msra.mxu0 0
        %793 = vmatprep.subr.bf16.mxu0 0
        %794 = vmatpush1.bf16.msra.mxu0 0
        %795 = vmatprep.subr.bf16.mxu0 0
        %796 = vmatpush1.bf16.msra.mxu0 0
        %797 = vmatprep.subr.bf16.mxu0 0
        %798 = vmatpush1.bf16.msra.mxu0 0
        %799 = vmatprep.subr.bf16.mxu0 0
        %800 = vmatpush1.bf16.msra.mxu0 %v773
        %801 = vmatprep.subr.bf16.mxu0 0
        %802 = vmatpush1.bf16.msra.mxu0 %v772
        %803 = vmatprep.subr.bf16.mxu0 0
        %804 = vmatpush1.bf16.msra.mxu0 %v771
        %805 = vmatprep.subr.bf16.mxu0 0
        %806 = vmatpush1.bf16.msra.mxu0 %v770
        %807 = vmatprep.subr.bf16.mxu0 0
        %808 = vmatpush2.bf16.msra.mxu0 0
        %809 = vmatprep.subr.bf16.mxu0 0
        %810 = vmatpush2.bf16.msra.mxu0 0
        %811 = vmatprep.subr.bf16.mxu0 0
        %812 = vmatpush2.bf16.msra.mxu0 0
        %813 = vmatprep.subr.bf16.mxu0 0
        %814 = vmatpush2.bf16.msra.mxu0 0
        %815 = vmatprep.subr.bf16.mxu0 0
        %816 = vmatpush2.bf16.msra.mxu0 0
        %817 = vmatprep.subr.bf16.mxu0 0
        %818 = vmatpush2.bf16.msra.mxu0 0
        %819 = vmatprep.subr.bf16.mxu0 0
        %820 = vmatpush2.bf16.msra.mxu0 0
        %821 = vmatprep.subr.bf16.mxu0 0
        %822 = vmatpush2.bf16.msra.mxu0 0
        %823 = vmatprep.mubr.bf16.mxu0 0
        %824 = vmatmul.mubr.bf16.gmra.mxu0 %v780
        %v825 = vpop.f32.mrf.mxu0
        %v826 = vadd.f32 0.0, %v825
        %v827 = vpop.f32.mrf.mxu0
        %v828 = vpop.f32.mrf.mxu0
        %v829 = vadd.f32 0.0, %v828
        %v830 = vpop.f32.mrf.mxu0
        %831 = vmatprep.mubr.bf16.mxu0 0
        %832 = vmatmul.mubr.bf16.gmra.mxu0 %v783
        %v833 = vpop.f32.mrf.mxu0
        %v834 = vadd.f32 0.0, %v833
        %v835 = vpop.f32.mrf.mxu0
        %v836 = vpop.f32.mrf.mxu0
        %v837 = vadd.f32 0.0, %v836
        %v838 = vpop.f32.mrf.mxu0
        %839 = vmatprep.mubr.bf16.mxu0 0
        %840 = vmatmul.mubr.bf16.gmra.mxu0 %v786
        %v841 = vpop.f32.mrf.mxu0
        %v842 = vadd.f32 0.0, %v841
        %v843 = vpop.f32.mrf.mxu0
        %v844 = vpop.f32.mrf.mxu0
        %v845 = vadd.f32 0.0, %v844
        %v846 = vpop.f32.mrf.mxu0
        %847 = vmatprep.mubr.bf16.mxu0 0
        %848 = vmatmul.mubr.bf16.gmra.mxu0 %v789
        %v849 = vpop.f32.mrf.mxu0
        %v850 = vadd.f32 0.0, %v849
        %v851 = vpop.f32.mrf.mxu0
        %v852 = vpop.f32.mrf.mxu0
        %v853 = vadd.f32 0.0, %v852
        %v854 = vpop.f32.mrf.mxu0
        %855 = vdwg.mxu0
        // Predicated region
        $region69: #{tpu_custom_call.1} parent=43 // pred_check
          %p856 = pneg %p305
        $region70: #{tpu_custom_call.1} parent=43 // pred_check_branch
          %858 = sbr.rel (%p856) target = $region72
        $region71: #{tpu_custom_call.1} parent=43 // pred_region
          %v859 = vld [vmem:[%s4] sm:$0x1]
          %v861 = vlaneseq
          %v862 = vshrl.u32 %v861, 7
          %v863 = vsub.s32 0, %v862
          %v864 = vrot.slane %v859, %v863
          %v866 = vadd.f32 %v826, %v864
          %v867 = vadd.f32 %v829, %v864
          %v868 = vadd.f32 %v834, %v864
          %v869 = vadd.f32 %v837, %v864
          %v870 = vadd.f32 %v842, %v864
          %v871 = vadd.f32 %v845, %v864
          %v872 = vadd.f32 %v850, %v864
          %v873 = vadd.f32 %v853, %v864
          %v874 = vmax.f32 %v866, 0.0
          %v875 = vmax.f32 %v867, 0.0
          %v876 = vmax.f32 %v868, 0.0
          %v877 = vmax.f32 %v869, 0.0
          %v878 = vmax.f32 %v870, 0.0
          %v879 = vmax.f32 %v871, 0.0
          %v880 = vmax.f32 %v872, 0.0
          %v881 = vmax.f32 %v873, 0.0
          %s882 = smul.u32 %s26, 64
          %v883 = vpack.c.bf16 %v875, %v874
          %v884 = vpack.c.bf16 %v877, %v876
          %v885 = vpack.c.bf16 %v879, %v878
          %v886 = vpack.c.bf16 %v881, %v880
          %v891 = vunpack.c.l.b16 %v883
          %v892 = vunpack.c.h.b16 %v883
          %v893 = vunpack.c.l.b16 %v884
          %v894 = vunpack.c.h.b16 %v884
          %v895 = vunpack.c.l.b16 %v885
          %v896 = vunpack.c.h.b16 %v885
          %v897 = vunpack.c.l.b16 %v886
          %v898 = vunpack.c.h.b16 %v886
          %v899 = vpack.c.b16 %v891, %v891
          %v900 = vpack.c.b16 %v892, %v892
          %v901 = vpack.c.b16 %v893, %v893
          %v902 = vpack.c.b16 %v894, %v894
          %v903 = vpack.c.b16 %v895, %v895
          %v904 = vpack.c.b16 %v896, %v896
          %v905 = vpack.c.b16 %v897, %v897
          %v906 = vpack.c.b16 %v898, %v898
          %s915 = sshra.s32 %s882, 3
          %s916 = sand.u32 %s882, 7
          %s917 = smul.addr %s915, 4
          %s918 = scalar_lea.vmem [#allocation3], %s917
          %919 = vst [vmem:[%s918] sm:$0xf] %v899
          %920 = vst [vmem:[%s918 + $0x4] sm:$0xf] %v900
          %921 = vst [vmem:[%s918 + $0x8] sm:$0xf] %v901
          %922 = vst [vmem:[%s918 + $0xc] sm:$0xf] %v902
          %923 = vst [vmem:[%s918 + $0x10] sm:$0xf] %v903
          %924 = vst [vmem:[%s918 + $0x14] sm:$0xf] %v904
          %925 = vst [vmem:[%s918 + $0x18] sm:$0xf] %v905
          %926 = vst [vmem:[%s918 + $0x1c] sm:$0xf] %v906
          %927 = vst [vmem:[#allocation12] sm:$0xff] %v874
          %928 = vst [vmem:[#allocation12 + $0x8] sm:$0xff] %v875
          %929 = vst [vmem:[#allocation12 + $0x10] sm:$0xff] %v876
          %930 = vst [vmem:[#allocation12 + $0x18] sm:$0xff] %v877
          %931 = vst [vmem:[#allocation12 + $0x20] sm:$0xff] %v878
          %932 = vst [vmem:[#allocation12 + $0x28] sm:$0xff] %v879
          %933 = vst [vmem:[#allocation12 + $0x30] sm:$0xff] %v880
          %934 = vst [vmem:[#allocation12 + $0x38] sm:$0xff] %v881
        $region72: #{tpu_custom_call.1} parent=43 // pred_fallthru
          _
        // Predicated region
        $region73: #{tpu_custom_call.1} parent=43 // pred_check
          %p935 = pneg %p512
        $region74: #{tpu_custom_call.1} parent=43 // pred_check_branch
          %937 = sbr.rel (%p935) target = $region76
        $region75: #{tpu_custom_call.1} parent=43 // pred_region
          %v938 = vld [vmem:[%s5] sm:$0x1]
          %v940 = vlaneseq
          %v941 = vshrl.u32 %v940, 7
          %v942 = vsub.s32 0, %v941
          %v943 = vrot.slane %v938, %v942
          %v945 = vadd.f32 %v826, %v943
          %v946 = vadd.f32 %v829, %v943
          %v947 = vadd.f32 %v834, %v943
          %v948 = vadd.f32 %v837, %v943
          %v949 = vadd.f32 %v842, %v943
          %v950 = vadd.f32 %v845, %v943
          %v951 = vadd.f32 %v850, %v943
          %v952 = vadd.f32 %v853, %v943
          %953 = vst [vmem:[#allocation12] sm:$0xff] %v945
          %954 = vst [vmem:[#allocation12 + $0x8] sm:$0xff] %v946
          %955 = vst [vmem:[#allocation12 + $0x10] sm:$0xff] %v947
          %956 = vst [vmem:[#allocation12 + $0x18] sm:$0xff] %v948
          %957 = vst [vmem:[#allocation12 + $0x20] sm:$0xff] %v949
          %958 = vst [vmem:[#allocation12 + $0x28] sm:$0xff] %v950
          %959 = vst [vmem:[#allocation12 + $0x30] sm:$0xff] %v951
          %960 = vst [vmem:[#allocation12 + $0x38] sm:$0xff] %v952
        $region76: #{tpu_custom_call.1} parent=43 // pred_fallthru
          _
        // Predicated region
        $region77: #{tpu_custom_call.1} parent=43 // pred_check
          %p961 = pneg %p182
        $region78: #{tpu_custom_call.1} parent=43 // pred_check_branch
          %963 = sbr.rel (%p961) target = $region80
        $region79: #{tpu_custom_call.1} parent=43 // pred_region
          %s964 = smul.u32 8, %s26
          %s966 = ssub.s32 1024, 1024
          %967 = vsyncadd [#allocation6], %s966
          %s968 = smul.addr %s964, 128
          %s969 = scalar_lea.hbm %s6, %s968
          %s970 = sshll.u32 [#allocation12], 4
          %s971 = int_to_ptr.vmem [resolvable:$true] %s970
          %976 = dma.vmem_to_hbm [thread:$0]  %s971, 1024, %s969, [#allocation6], 128, 128, 8
        $region80: #{tpu_custom_call.1} parent=43 // pred_fallthru
          _
        // Predicated region
        $region81: #{tpu_custom_call.1} parent=43 // pred_check
          %p977 = pneg %p182
        $region82: #{tpu_custom_call.1} parent=43 // pred_check_branch
          %979 = sbr.rel (%p977) target = $region84
        $region83: #{tpu_custom_call.1} parent=43 // pred_region
          %980 = dma.done [#allocation6], 1024
        $region84: #{tpu_custom_call.1} parent=43 // pred_fallthru
          _
      $region44: #{tpu_custom_call.1} parent=5 // pred_fallthru
        _
      %p981 = scmp.le.s32.totalorder 2, %s16
      // Predicated region
      $region85: #{tpu_custom_call.1} parent=5 // pred_check
        %p982 = pneg %p981
      $region86: #{tpu_custom_call.1} parent=5 // pred_check_branch
        %984 = sbr.rel (%p982) target = $region88
      $region87: #{tpu_custom_call.1} parent=5 // pred_region
        %s985 = ssub.s32 %s16, 2
      $region88: #{tpu_custom_call.1} parent=5 // pred_fallthru
        _
    $region6: #{tpu_custom_call.1} parent=1 // loop_footer
      %s20 = sadd.s32 1, %s16
    $region7: #{tpu_custom_call.1} parent=1 // loop_footer_branch
      %15 = sbr.rel target = $region3
    $region8: #{tpu_custom_call.1} parent=1 // loop_exit
      _
    %986 = vsyncpa [#allocation5], 1
    %s987 = scalar_lea.sflag [#allocation5], 1
    %988 = vsyncpa %s987, 1
    %989 = vsyncpa [#allocation8], 1
    %990 = vsyncpa [#allocation11], 1
    %991 = vsyncpa [#allocation6], 1
    %s992 = scalar_lea.sflag [#allocation6], 1
    %993 = vsyncpa %s992, 1

</llo_original>
